<compile_context>
chip_gen: v7x
topology: tpu7x:2x2x1
jax: 0.10.0
libtpu: 0.0.40
codegen_flags: <defaults>
</compile_context>

<pallas_src>
import functools

import jax
import jax.numpy as jnp
from jax.experimental import pallas as pl
from jax.experimental.pallas import tpu as pltpu

# ScalingLayer registered buffers from the module's __init__ (num_dims=4).
SHIFT = jnp.array([-0.03, -0.088, -0.188], dtype=jnp.float32)
SCALE = jnp.array([0.458, 0.448, 0.45], dtype=jnp.float32)

_VMEM_LIMIT = 32 * 1024 * 1024          # safe on v5e/v6e (128 MiB) and v7x (64 MiB)
_BLOCK_BYTES_BUDGET = 2 * 1024 * 1024   # per-input per-block VMEM budget


def _pick_lane_tile(hw, c, *, bytes_per_elem=4, block_bytes_budget=_BLOCK_BYTES_BUDGET):
    """Largest lane-dense (multiple-of-128) tile along flattened H*W that divides hw
    and keeps one (1, c, T) block under `block_bytes_budget`."""
    max_elems = max(128, ((block_bytes_budget // (c * bytes_per_elem)) // 128) * 128)
    if hw <= max_elems:
        return hw                               # single full-extent tile
    t = min(max_elems, (hw // 128) * 128)
    while t >= 128:
        if hw % t == 0:
            return t
        t -= 128
    return hw                                   # no lane-dense divisor: full extent


# ---------------------------------------------------------------------------
# 1) ScalingLayer for a pair of inputs: (x - shift) / scale  ==  (x - shift) * inv_scale
# ---------------------------------------------------------------------------
def _scaling_pair_kernel(shift_ref, inv_scale_ref, x0_ref, x1_ref, o0_ref, o1_ref):
    # shift/inv_scale: VMEM (1, C, 1); x*/o*: VMEM (1, C, T), lane-dense T.
    sh = shift_ref[...]
    isc = inv_scale_ref[...]
    o0_ref[...] = ((x0_ref[...] - sh) * isc).astype(o0_ref.dtype)
    o1_ref[...] = ((x1_ref[...] - sh) * isc).astype(o1_ref.dtype)


def scaling_layer_pair(x0, x1, shift=SHIFT, scale=SCALE, *,
                       block_bytes_budget=_BLOCK_BYTES_BUDGET):
    """LPIPS ScalingLayer applied to both images in a single pallas_call."""
    assert x0.shape == x1.shape
    N, C, H, W = x0.shape
    HW = H * W
    T = _pick_lane_tile(HW, C, block_bytes_budget=block_bytes_budget)
    n_hw = pl.cdiv(HW, T)

    x0_2 = x0.reshape(N, C, HW)
    x1_2 = x1.reshape(N, C, HW)
    shift3 = shift.astype(jnp.float32).reshape(1, C, 1)
    inv_scale3 = (1.0 / scale.astype(jnp.float32)).reshape(1, C, 1)

    out0, out1 = pl.pallas_call(
        _scaling_pair_kernel,
        out_shape=(jax.ShapeDtypeStruct((N, C, HW), x0.dtype),
                   jax.ShapeDtypeStruct((N, C, HW), x1.dtype)),
        grid=(N, n_hw),
        in_specs=[
            pl.BlockSpec((1, C, 1), lambda n, j: (0, 0, 0)),   # shift
            pl.BlockSpec((1, C, 1), lambda n, j: (0, 0, 0)),   # 1/scale
            pl.BlockSpec((1, C, T), lambda n, j: (n, 0, j)),   # in0
            pl.BlockSpec((1, C, T), lambda n, j: (n, 0, j)),   # in1
        ],
        out_specs=(pl.BlockSpec((1, C, T), lambda n, j: (n, 0, j)),
                   pl.BlockSpec((1, C, T), lambda n, j: (n, 0, j))),
        compiler_params=pltpu.CompilerParams(
            dimension_semantics=("parallel", "parallel"),      # no carry anywhere
            vmem_limit_bytes=_VMEM_LIMIT,
        ),
        cost_estimate=pl.CostEstimate(
            flops=4 * N * C * HW,
            transcendentals=0,
            bytes_accessed=(4 * N * C * HW + 2 * C) * 4,
        ),
    )(shift3, inv_scale3, x0_2, x1_2)
    return out0.reshape(N, C, H, W), out1.reshape(N, C, H, W)


# ---------------------------------------------------------------------------
# 2) Fused LPIPS head (per backbone layer):
#    normalize_tensor(f0/f1) -> (diff)^2 -> 1x1 conv (lin weights) -> spatial mean
# ---------------------------------------------------------------------------
def _lpips_head_kernel(w_ref, f0_ref, f1_ref, o_ref, *, inv_hw):
    # w_ref: VMEM (1, C, 1); f0/f1: VMEM (1, C, T); o_ref: VMEM (1, 1), resident
    # across the H*W grid axis (same output block index for every j) -> accumulator.
    j = pl.program_id(1)

    @pl.when(j == 0)
    def _():
        o_ref[...] = jnp.zeros_like(o_ref)

    f0 = f0_ref[...].astype(jnp.float32)
    f1 = f1_ref[...].astype(jnp.float32)
    eps = jnp.float32(1e-10)
    # util.normalize_tensor: x / (sqrt(sum_c x^2) + eps)
    inv0 = 1.0 / (jnp.sqrt(jnp.sum(f0 * f0, axis=1, keepdims=True)) + eps)   # (1,1,T)
    inv1 = 1.0 / (jnp.sqrt(jnp.sum(f1 * f1, axis=1, keepdims=True)) + eps)
    d = f0 * inv0 - f1 * inv1                         # unit-normalized difference
    wdd = w_ref[...] * (d * d)                        # bias-free 1x1 conv weights
    per_lane = jnp.sum(wdd, axis=1)                   # (1, T): channel (sublane) reduce
    o_ref[...] += jnp.sum(per_lane, axis=1, keepdims=True)   # (1, 1): lane reduce

    @pl.when(j == pl.num_programs(1) - 1)
    def _():
        o_ref[...] = o_ref[...] * jnp.float32(inv_hw)  # spatial mean, fused in-kernel


def lpips_head_layer(f0, f1, w, *, block_bytes_budget=_BLOCK_BYTES_BUDGET):
    """spatial_average(NetLinLayer(w)((norm(f0)-norm(f1))**2)) -> shape (N, 1)."""
    assert f0.shape == f1.shape
    N, C, H, W = f0.shape
    HW = H * W
    T = _pick_lane_tile(HW, C, block_bytes_budget=block_bytes_budget)
    n_hw = pl.cdiv(HW, T)

    f0_2 = f0.reshape(N, C, HW)
    f1_2 = f1.reshape(N, C, HW)
    w3 = w.astype(jnp.float32).reshape(1, C, 1)

    kernel = functools.partial(_lpips_head_kernel, inv_hw=1.0 / float(HW))

    means = pl.pallas_call(
        kernel,
        out_shape=jax.ShapeDtypeStruct((N, 1), jnp.float32),
        grid=(N, n_hw),
        in_specs=[
            pl.BlockSpec((1, C, 1), lambda n, j: (0, 0, 0)),   # lin weights
            pl.BlockSpec((1, C, T), lambda n, j: (n, 0, j)),   # feats of input 0
            pl.BlockSpec((1, C, T), lambda n, j: (n, 0, j)),   # feats of input 1
        ],
        out_specs=pl.BlockSpec((1, 1), lambda n, j: (n, 0)),
        compiler_params=pltpu.CompilerParams(
            dimension_semantics=("parallel", "arbitrary"),     # j axis accumulates
            vmem_limit_bytes=_VMEM_LIMIT,
        ),
        cost_estimate=pl.CostEstimate(
            flops=10 * N * C * HW,
            transcendentals=2 * N * HW,
            bytes_accessed=(2 * N * C * HW + C + N) * 4,
        ),
    )(w3, f0_2, f1_2)
    return means   # already the spatial mean, shape (N, 1)


# ---------------------------------------------------------------------------
# PNetLinAlex.forward (AlexNet trunk stubbed out)
# ---------------------------------------------------------------------------
def pnet_lin_alex_forward(in0, in1, feats0, feats1, lin_weights, ret_per_layer=False):
    """in0/in1: (1, 3, H, W) raw images; feats*/lin_weights: per-layer stand-ins.

    Returns val with shape (1, 1, 1, 1), matching spatial_average(..., keepdim=True)
    (which, as written in the reference module, requires batch == 1).
    """
    assert in0.shape[0] == 1, "spatial_average(keepdim=True) in the module assumes B == 1"
    in0_scaled, in1_scaled = scaling_layer_pair(in0, in1)
    # TODO(synk): outs0/outs1 = alexnet(in0_scaled/in1_scaled) — the pretrained
    # AlexNet trunk has no in-script Pallas translation; stand-in features are used.
    del in0_scaled, in1_scaled

    res = [lpips_head_layer(f0, f1, w)
           for f0, f1, w in zip(feats0, feats1, lin_weights)]
    val = res[0]
    for r in res[1:]:
        val = val + r
    val = val.reshape(1, 1, 1, 1)
    if ret_per_layer:
        return val, [r.reshape(1, 1, 1, 1) for r in res]
    return val


# ---------------------------------------------------------------------------
if __name__ == "__main__":
    key = jax.random.PRNGKey(0)
    k_in0, k_in1, k_big0, k_big1, k_feat = jax.random.split(key, 5)

    # Batch 1: the module's spatial_average(keepdim=True) assumes B == 1.
    N, H, W = 1, 16, 16
    in0 = jax.random.normal(k_in0, (N, 3, H, W), dtype=jnp.float32)
    in1 = jax.random.normal(k_in1, (N, 3, H, W), dtype=jnp.float32)

    # --- ScalingLayer kernel check -------------------------------------------------
    s0, s1 = scaling_layer_pair(in0, in1)
    s0, s1 = jax.block_until_ready(s0), jax.block_until_ready(s1)
    ref0 = (in0 - SHIFT[None, :, None, None]) / SCALE[None, :, None, None]
    ref1 = (in1 - SHIFT[None, :, None, None]) / SCALE[None, :, None, None]
    assert s0.shape == in0.shape and s1.shape == in1.shape
    assert jnp.allclose(s0, ref0, atol=1e-6, rtol=1e-6)
    assert jnp.allclose(s1, ref1, atol=1e-6, rtol=1e-6)

    # Multi-tile path (several lane-dense tiles along H*W, parallel N axis).
    xa = jax.random.normal(k_big0, (2, 3, 32, 32), dtype=jnp.float32)
    xb = jax.random.normal(k_big1, (2, 3, 32, 32), dtype=jnp.float32)
    oa, ob = scaling_layer_pair(xa, xb, block_bytes_budget=4096)   # T=256, 4 tiles
    oa, ob = jax.block_until_ready(oa), jax.block_until_ready(ob)
    assert jnp.allclose(oa, (xa - SHIFT[None, :, None, None]) / SCALE[None, :, None, None],
                        atol=1e-6, rtol=1e-6)
    assert jnp.allclose(ob, (xb - SHIFT[None, :, None, None]) / SCALE[None, :, None, None],
                        atol=1e-6, rtol=1e-6)

    # --- Fused LPIPS head kernel check ---------------------------------------------
    chns = [64, 192, 384, 256, 256]       # self.chns of PNetLinAlex
    spat = [16, 16, 8, 8, 8]              # small stand-in spatial sizes
    feats0, feats1, lin_w = [], [], []
    kf = k_feat
    for c, s in zip(chns, spat):
        kf, ka, kb, kw = jax.random.split(kf, 4)
        feats0.append(jax.random.normal(ka, (N, c, s, s), dtype=jnp.float32))
        feats1.append(jax.random.normal(kb, (N, c, s, s), dtype=jnp.float32))
        # LPIPS lin weights are non-negative 1x1 convs; keep them small & positive.
        lin_w.append(jnp.abs(jax.random.normal(kw, (c,), dtype=jnp.float32)) / c)

    def head_ref(f0, f1, w):
        eps = 1e-10
        n0 = jnp.sqrt(jnp.sum(f0 * f0, axis=1, keepdims=True))
        n1 = jnp.sqrt(jnp.sum(f1 * f1, axis=1, keepdims=True))
        d = f0 / (n0 + eps) - f1 / (n1 + eps)
        conv = jnp.sum(w[None, :, None, None] * d * d, axis=1, keepdims=True)
        return jnp.mean(conv.reshape(f0.shape[0], 1, -1), axis=-1)   # (N, 1)

    val_ref = head_ref(feats0[0], feats1[0], lin_w[0])
    for kk in range(1, len(chns)):
        val_ref = val_ref + head_ref(feats0[kk], feats1[kk], lin_w[kk])

    val = jax.block_until_ready(pnet_lin_alex_forward(in0, in1, feats0, feats1, lin_w))
    assert val.shape == (1, 1, 1, 1)
    assert jnp.allclose(val.reshape(N, 1), val_ref, rtol=1e-4, atol=1e-5)

    # Exercise the multi-tile accumulation path of the head kernel too (T=128, 2 tiles).
    r_small = jax.block_until_ready(
        lpips_head_layer(feats0[0], feats1[0], lin_w[0], block_bytes_budget=32768))
    assert jnp.allclose(r_small, head_ref(feats0[0], feats1[0], lin_w[0]),
                        rtol=1e-4, atol=1e-5)

    print("KERNEL_OK")
</pallas_src>

<mosaic_0001>
module attributes {stable_mosaic.version = 11 : i64} {
  func.func @_scaling_pair_kernel(%arg0: i32, %arg1: i32, %arg2: memref<1x3x1xf32, #tpu.memory_space<vmem>>, %arg3: memref<1x3x1xf32, #tpu.memory_space<vmem>>, %arg4: memref<1x3x256xf32, #tpu.memory_space<vmem>>, %arg5: memref<1x3x256xf32, #tpu.memory_space<vmem>>, %arg6: memref<1x3x256xf32, #tpu.memory_space<vmem>>, %arg7: memref<1x3x256xf32, #tpu.memory_space<vmem>>) attributes {dimension_semantics = [#tpu.dimension_semantics<parallel>, #tpu.dimension_semantics<parallel>], iteration_bounds = array<i64: 1, 1>, scalar_prefetch = 0 : i64, scratch_operands = 0 : i64, tpu.core_type = #tpu.core_type<tc>, window_params = [{pipeline_mode = #tpu.pipeline_mode<synchronous>, transform_indices = @transform_0, window_bounds = array<i64: 1, 3, 1>}, {pipeline_mode = #tpu.pipeline_mode<synchronous>, transform_indices = @transform_1, window_bounds = array<i64: 1, 3, 1>}, {transform_indices = @transform_2, window_bounds = array<i64: 1, 3, 256>}, {transform_indices = @transform_3, window_bounds = array<i64: 1, 3, 256>}, {transform_indices = @transform_4, window_bounds = array<i64: 1, 3, 256>}, {transform_indices = @transform_5, window_bounds = array<i64: 1, 3, 256>}]} {
    %c0 = arith.constant 0 : index
    %c0_0 = arith.constant 0 : index
    %c0_1 = arith.constant 0 : index
    %0 = vector.load %arg2[%c0, %c0_0, %c0_1] : memref<1x3x1xf32, #tpu.memory_space<vmem>>, vector<1x3x1xf32>
    %c0_2 = arith.constant 0 : index
    %c0_3 = arith.constant 0 : index
    %c0_4 = arith.constant 0 : index
    %1 = vector.load %arg3[%c0_2, %c0_3, %c0_4] : memref<1x3x1xf32, #tpu.memory_space<vmem>>, vector<1x3x1xf32>
    %c0_5 = arith.constant 0 : index
    %c0_6 = arith.constant 0 : index
    %c0_7 = arith.constant 0 : index
    %2 = vector.load %arg4[%c0_5, %c0_6, %c0_7] : memref<1x3x256xf32, #tpu.memory_space<vmem>>, vector<1x3x256xf32>
    %3 = vector.broadcast %0 : vector<1x3x1xf32> to vector<1x3x256xf32>
    %4 = arith.subf %2, %3 : vector<1x3x256xf32>
    %5 = vector.broadcast %1 : vector<1x3x1xf32> to vector<1x3x256xf32>
    %6 = arith.mulf %4, %5 : vector<1x3x256xf32>
    %c0_8 = arith.constant 0 : index
    %c0_9 = arith.constant 0 : index
    %c0_10 = arith.constant 0 : index
    %7 = vector.load %arg6[%c0_8, %c0_9, %c0_10] : memref<1x3x256xf32, #tpu.memory_space<vmem>>, vector<1x3x256xf32>
    tpu.vector_store %arg6[%c0_8, %c0_9, %c0_10], %6 {strides = array<i32>} : memref<1x3x256xf32, #tpu.memory_space<vmem>>, vector<1x3x256xf32>,
    %c0_11 = arith.constant 0 : index
    %c0_12 = arith.constant 0 : index
    %c0_13 = arith.constant 0 : index
    %8 = vector.load %arg5[%c0_11, %c0_12, %c0_13] : memref<1x3x256xf32, #tpu.memory_space<vmem>>, vector<1x3x256xf32>
    %9 = vector.broadcast %0 : vector<1x3x1xf32> to vector<1x3x256xf32>
    %10 = arith.subf %8, %9 : vector<1x3x256xf32>
    %11 = vector.broadcast %1 : vector<1x3x1xf32> to vector<1x3x256xf32>
    %12 = arith.mulf %10, %11 : vector<1x3x256xf32>
    %c0_14 = arith.constant 0 : index
    %c0_15 = arith.constant 0 : index
    %c0_16 = arith.constant 0 : index
    %13 = vector.load %arg7[%c0_14, %c0_15, %c0_16] : memref<1x3x256xf32, #tpu.memory_space<vmem>>, vector<1x3x256xf32>
    tpu.vector_store %arg7[%c0_14, %c0_15, %c0_16], %12 {strides = array<i32>} : memref<1x3x256xf32, #tpu.memory_space<vmem>>, vector<1x3x256xf32>,
    return
  }
  func.func @transform_0(%arg0: i32, %arg1: i32) -> (i32, i32, i32) {
    %c0_i32 = arith.constant 0 : i32
    %c0_i32_0 = arith.constant 0 : i32
    %c0_i32_1 = arith.constant 0 : i32
    %c0_i32_2 = arith.constant 0 : i32
    return %c0_i32, %c0_i32_0, %c0_i32_1 : i32, i32, i32
  }
  func.func @transform_1(%arg0: i32, %arg1: i32) -> (i32, i32, i32) {
    %c0_i32 = arith.constant 0 : i32
    %c0_i32_0 = arith.constant 0 : i32
    %c0_i32_1 = arith.constant 0 : i32
    %c0_i32_2 = arith.constant 0 : i32
    return %c0_i32, %c0_i32_0, %c0_i32_1 : i32, i32, i32
  }
  func.func @transform_2(%arg0: i32, %arg1: i32) -> (i32, i32, i32) {
    %c0_i32 = arith.constant 0 : i32
    %c0_i32_0 = arith.constant 0 : i32
    return %arg0, %c0_i32, %arg1 : i32, i32, i32
  }
  func.func @transform_3(%arg0: i32, %arg1: i32) -> (i32, i32, i32) {
    %c0_i32 = arith.constant 0 : i32
    %c0_i32_0 = arith.constant 0 : i32
    return %arg0, %c0_i32, %arg1 : i32, i32, i32
  }
  func.func @transform_4(%arg0: i32, %arg1: i32) -> (i32, i32, i32) {
    %c0_i32 = arith.constant 0 : i32
    %c0_i32_0 = arith.constant 0 : i32
    return %arg0, %c0_i32, %arg1 : i32, i32, i32
  }
  func.func @transform_5(%arg0: i32, %arg1: i32) -> (i32, i32, i32) {
    %c0_i32 = arith.constant 0 : i32
    %c0_i32_0 = arith.constant 0 : i32
    return %arg0, %c0_i32, %arg1 : i32, i32, i32
  }
}

</mosaic_0001>

<llo_original>
// kernel: tpu_custom_call.1
$region0: #{tpu_custom_call.1}
  #allocation0 [shape = 'u32[]', space=smem, size = 0x4, offset = 0x4, fixed_abs, tag = 'smem constant byte address 0x4 - core index']
  #allocation1 [shape = 'u32[144,128]{1,0:T(1,128)}', space=vmem, size = 0x12000, scoped, tag = 'internal scratch']
  %s0 = inlined_call_operand.vmem [shape: f32[1,3,1], index: 0, kind: input, shape index: {}]
  %s1 = inlined_call_operand.vmem [shape: f32[1,3,1], index: 1, kind: input, shape index: {}]
  %s2 = inlined_call_operand.vmem [shape: f32[1,3,256], index: 2, kind: input, shape index: {}]
  %s3 = inlined_call_operand.vmem [shape: f32[1,3,256], index: 3, kind: input, shape index: {}]
  %s4 = inlined_call_operand.vmem [shape: f32[1,3,256], index: 4, kind: output, shape index: {0}]
  %s5 = inlined_call_operand.vmem [shape: f32[1,3,256], index: 5, kind: output, shape index: {1}]
  %6 = xla_tuple %s4, %s5
  %s7 = sld [smem:[#allocation0]]
  $region34: #{tpu_custom_call.1} parent=0
    _
  %s9 = ssub.s32 1, %s7
  %s10 = scalar_select 0, %s9, %s7
  // Predicated region
  $region2: #{tpu_custom_call.1} parent=0 // pred_check
    _
  $region3: #{tpu_custom_call.1} parent=0 // pred_check_branch
    %12 = sbr.rel (0) target = $region5
  $region4: #{tpu_custom_call.1} parent=0 // pred_region
    _
  $region5: #{tpu_custom_call.1} parent=0 // pred_fallthru
    _
  // Predicated region
  $region6: #{tpu_custom_call.1} parent=0 // pred_check
    _
  $region7: #{tpu_custom_call.1} parent=0 // pred_check_branch
    %14 = sbr.rel (0) target = $region9
  $region8: #{tpu_custom_call.1} parent=0 // pred_region
    _
  $region9: #{tpu_custom_call.1} parent=0 // pred_fallthru
    _
  // Predicated region
  $region10: #{tpu_custom_call.1} parent=0 // pred_check
    _
  $region11: #{tpu_custom_call.1} parent=0 // pred_check_branch
    %16 = sbr.rel (0) target = $region13
  $region12: #{tpu_custom_call.1} parent=0 // pred_region
    _
  $region13: #{tpu_custom_call.1} parent=0 // pred_fallthru
    _
  // Predicated region
  $region14: #{tpu_custom_call.1} parent=0 // pred_check
    _
  $region15: #{tpu_custom_call.1} parent=0 // pred_check_branch
    %18 = sbr.rel (0) target = $region17
  $region16: #{tpu_custom_call.1} parent=0 // pred_region
    _
  $region17: #{tpu_custom_call.1} parent=0 // pred_fallthru
    _
  %v19 = vld [vmem:[%s0] sm:$0x7]
  %v20 = vld [vmem:[%s1] sm:$0x7]
  %v21 = vld [vmem:[%s2] sm:$0x77]
  %23 = vset.pattern.permute.xlu0 0
  %24 = vperm.xlu0 %23, %v19
  %v25 = vpop.permute.xlu0 %24
  %v27 = vunpack.c.l.s4 839922192
  %v28 = vunpack.c.0.s8 %v27
  %v29 = vlaneseq
  %v30 = vshrl.u32 %v29, 7
  %v31 = vsub.s32 %v28, %v30
  %v32 = vrot.slane %v25, %v31
  %v34 = vsub.f32 %v21, %v32
  %36 = vset.pattern.permute.xlu0 0
  %37 = vperm.xlu0 %36, %v20
  %v38 = vpop.permute.xlu0 %37
  %v40 = vunpack.c.l.s4 839922192
  %v41 = vunpack.c.0.s8 %v40
  %v42 = vlaneseq
  %v43 = vshrl.u32 %v42, 7
  %v44 = vsub.s32 %v41, %v43
  %v45 = vrot.slane %v38, %v44
  %v47 = vmul.f32 %v34, %v45
  %48 = vst [vmem:[%s4] sm:$0x77] %v47
  %v49 = vld [vmem:[%s3] sm:$0x77]
  %v50 = vsub.f32 %v49, %v32
  %v51 = vmul.f32 %v50, %v45
  %52 = vst [vmem:[%s5] sm:$0x77] %v51
  // Predicated region
  $region18: #{tpu_custom_call.1} parent=0 // pred_check
    _
  $region19: #{tpu_custom_call.1} parent=0 // pred_check_branch
    %54 = sbr.rel (0) target = $region21
  $region20: #{tpu_custom_call.1} parent=0 // pred_region
    _
  $region21: #{tpu_custom_call.1} parent=0 // pred_fallthru
    _
  // Predicated region
  $region22: #{tpu_custom_call.1} parent=0 // pred_check
    _
  $region23: #{tpu_custom_call.1} parent=0 // pred_check_branch
    %56 = sbr.rel (0) target = $region25
  $region24: #{tpu_custom_call.1} parent=0 // pred_region
    _
  $region25: #{tpu_custom_call.1} parent=0 // pred_fallthru
    _
  // Predicated region
  $region26: #{tpu_custom_call.1} parent=0 // pred_check
    _
  $region27: #{tpu_custom_call.1} parent=0 // pred_check_branch
    %58 = sbr.rel (0) target = $region29
  $region28: #{tpu_custom_call.1} parent=0 // pred_region
    _
  $region29: #{tpu_custom_call.1} parent=0 // pred_fallthru
    _
  // Predicated region
  $region30: #{tpu_custom_call.1} parent=0 // pred_check
    _
  $region31: #{tpu_custom_call.1} parent=0 // pred_check_branch
    %60 = sbr.rel (0) target = $region33
  $region32: #{tpu_custom_call.1} parent=0 // pred_region
    _
  $region33: #{tpu_custom_call.1} parent=0 // pred_fallthru
    _

</llo_original>
